<compile_context>
chip_gen: v6e
topology: v6e:2x2x1
jax: 0.10.0
libtpu: 0.0.40
codegen_flags: <defaults>
</compile_context>

<pallas_src>
import functools
import math

import jax
import jax.numpy as jnp
from jax.experimental import pallas as pl
from jax.experimental.pallas import tpu as pltpu


# ----------------------------------------------------------------------------
# Kernel 1: paired batch mixing with pipelined (deferred-wait) output stores.
#   for each mirrored pair (p, B-1-p), per row tile (s, r):
#     mixed[p]     = x[p]     * lam + x[B-1-p] * (1-lam)
#     mixed[B-1-p] = x[B-1-p] * lam + x[p]     * (1-lam)
# ----------------------------------------------------------------------------
def _mix_pair_kernel(lam_ref, xa_ref, xb_ref, o_hbm, oa_buf, ob_buf, sems,
                     *, batch, block_rows, rows_per_split):
    p = pl.program_id(0)
    s = pl.program_id(1)
    r = pl.program_id(2)
    n_r = pl.num_programs(2)
    lam = lam_ref[0]

    a_idx = p
    b_idx = batch - 1 - p
    write_b = b_idx != a_idx            # False only for the odd-batch middle sample
    slot = r % 2                        # double-buffer slot for the output scratch

    def for_b(fn):
        # Skip the duplicate mirror write/wait for the odd-batch middle sample.
        # (The guard is uniform across the whole (p, s) sweep, so starts and
        #  waits always match.)
        if batch % 2 == 1:
            pl.when(write_b)(fn)
        else:
            fn()

    def drain(which_slot):
        # Waits only use the semaphore + transfer size; the row offset used to
        # build the descriptor is irrelevant.
        pltpu.make_async_copy(
            oa_buf.at[which_slot], o_hbm.at[a_idx, pl.ds(0, block_rows), :],
            sems.at[which_slot, 0]).wait()

        def _wb():
            pltpu.make_async_copy(
                ob_buf.at[which_slot], o_hbm.at[b_idx, pl.ds(0, block_rows), :],
                sems.at[which_slot, 1]).wait()
        for_b(_wb)

    # 1) Retire the stores issued two steps ago on this slot before reusing it.
    @pl.when(r >= 2)
    def _():
        drain(slot)

    # 2) Compute both mixed tiles for the mirrored pair (each input tile is
    #    read from HBM exactly once).
    xa = xa_ref[0]                      # (block_rows, 128) tile of x[p]
    xb = xb_ref[0]                      # (block_rows, 128) tile of x[batch-1-p]
    oa_buf[slot] = (xa * lam + xb * (1.0 - lam)).astype(oa_buf.dtype)
    ob_buf[slot] = (xb * lam + xa * (1.0 - lam)).astype(ob_buf.dtype)

    # 3) Kick off this step's stores; do NOT wait (overlaps with the next
    #    step's input prefetch + compute).
    row0 = pl.multiple_of(s * rows_per_split + r * block_rows, block_rows)
    pltpu.make_async_copy(
        oa_buf.at[slot], o_hbm.at[a_idx, pl.ds(row0, block_rows), :],
        sems.at[slot, 0]).start()

    def _start_b():
        pltpu.make_async_copy(
            ob_buf.at[slot], o_hbm.at[b_idx, pl.ds(row0, block_rows), :],
            sems.at[slot, 1]).start()
    for_b(_start_b)

    # 4) End of this (p, s) row sweep: drain every outstanding store so no DMA
    #    crosses the boundary where the parallel axes advance.
    @pl.when(r == n_r - 1)
    def _():
        drain(slot)

        @pl.when(r >= 1)
        def _():
            drain(1 - slot)


def _pick_block_rows(rows, max_rows, sub):
    """Largest divisor of `rows` that is a multiple of `sub` and <= max_rows.

    `rows` is guaranteed (by padding in mixup_x) to be a multiple of `sub`, so
    the search always succeeds with a value >= `sub`; the old "return full row
    extent" fallback (which could blow VMEM on v7x) is gone.
    """
    max_rows = max(sub, min(max_rows, rows))
    for cand in range(max_rows, sub - 1, -1):
        if rows % cand == 0 and cand % sub == 0:
            return cand
    return sub  # unreachable when rows % sub == 0; safe (tiny) either way


def mixup_x(x, lam, *, target_tile_bytes=2 << 20, vmem_budget_bytes=24 << 20):
    """x: (B, ...) float, lam scalar -> x * lam + flip(x, 0) * (1 - lam)."""
    B = x.shape[0]
    assert B > 1, "MixUp cannot be applied to a single instance."
    N = math.prod(x.shape[1:])
    itemsize = jnp.dtype(x.dtype).itemsize
    # Dtype-aware sublane multiple: f32 -> 8, bf16 -> 16, int8/fp8 -> 32.
    sub = max(8, 32 // itemsize)
    align = 128 * sub

    xf = x.reshape(B, N)
    pad = (-N) % align
    if pad:
        # TODO(synk): masked in-kernel tail DMA would avoid this extra pass.
        xf = jnp.pad(xf, ((0, 0), (0, pad)))
    Np = N + pad
    R = Np // 128                         # multiple of `sub` by construction

    bytes_per_row = 128 * itemsize
    max_rows = min(target_tile_bytes // bytes_per_row,
                   vmem_budget_bytes // (8 * bytes_per_row))
    TR = _pick_block_rows(R, max_rows, sub)       # rows per tile
    nR = R // TR
    RS = 2 if nR % 2 == 0 else 1          # row-split so v7x's 2nd TC has work even when HP==1
    nRi = nR // RS
    rows_per_split = nRi * TR
    HP = (B + 1) // 2                     # number of mirrored pairs

    x3 = xf.reshape(B, R, 128)
    lam_arr = jnp.asarray(lam, jnp.float32).reshape((1,))

    kernel = functools.partial(_mix_pair_kernel, batch=B, block_rows=TR,
                               rows_per_split=rows_per_split)
    out3 = pl.pallas_call(
        kernel,
        out_shape=jax.ShapeDtypeStruct((B, R, 128), x.dtype),
        grid=(HP, RS, nRi),
        in_specs=[
            pl.BlockSpec(memory_space=pltpu.MemorySpace.SMEM),              # lam
            pl.BlockSpec((1, TR, 128), lambda p, s, r: (p, s * nRi + r, 0)),          # x[p]
            pl.BlockSpec((1, TR, 128), lambda p, s, r: (B - 1 - p, s * nRi + r, 0)),  # x[B-1-p]
        ],
        out_specs=pl.BlockSpec(memory_space=pl.ANY),        # manual DMA writes
        scratch_shapes=[
            pltpu.VMEM((2, TR, 128), x.dtype),    # mixed[p] tiles (double-buffered)
            pltpu.VMEM((2, TR, 128), x.dtype),    # mixed[B-1-p] tiles (double-buffered)
            pltpu.SemaphoreType.DMA((2, 2)),      # [slot, a/b]
        ],
        compiler_params=pltpu.CompilerParams(
            dimension_semantics=("parallel", "parallel", "arbitrary"),
            vmem_limit_bytes=32 << 20),
        cost_estimate=pl.CostEstimate(
            flops=3 * B * Np,
            transcendentals=0,
            bytes_accessed=2 * B * Np * itemsize),  # 1 read + 1 write per elem
    )(lam_arr, x3, x3)

    out = out3.reshape(B, Np)
    if pad:
        out = out[:, :N]
    return out.reshape(x.shape)


# ----------------------------------------------------------------------------
# Kernel 2: one-hot (with label smoothing) + mix of labels and flipped labels.
#   off = smoothing / num_classes ; on = 1 - smoothing + off
#   out = onehot(labels)*lam + onehot(flip(labels))*(1-lam)
# Output is lane-padded to a multiple of 128 classes, then sliced outside.
# (Tiny; launch-overhead dominated — left structurally unchanged per review.)
# ----------------------------------------------------------------------------
def _mix_labels_kernel(lam_ref, lab_ref, lab_flip_ref, o_ref,
                       *, num_classes, label_smoothing):
    lam = lam_ref[0]
    B, NCp = o_ref.shape
    off_val = jnp.float32(label_smoothing / num_classes)
    on_val = jnp.float32(1.0 - label_smoothing + label_smoothing / num_classes)

    classes = jax.lax.broadcasted_iota(jnp.int32, (B, NCp), 1)
    oh1 = jnp.where(classes == lab_ref[...], on_val, off_val)        # (B, NCp)
    oh2 = jnp.where(classes == lab_flip_ref[...], on_val, off_val)
    o_ref[...] = oh1 * lam + oh2 * (1.0 - lam)


def mixup_labels(labels, num_classes, lam, label_smoothing):
    """labels: (B,) int -> (B, num_classes) float32 mixed soft labels."""
    B = labels.shape[0]
    lab = labels.astype(jnp.int32).reshape(B, 1)
    lab_flip = lab[::-1, :]          # glue: batch flip of the tiny label vec
    lam_arr = jnp.asarray(lam, jnp.float32).reshape((1,))
    nc_pad = ((num_classes + 127) // 128) * 128   # lane-dense unmasked stores

    kernel = functools.partial(_mix_labels_kernel,
                               num_classes=num_classes,
                               label_smoothing=label_smoothing)
    out = pl.pallas_call(
        kernel,
        out_shape=jax.ShapeDtypeStruct((B, nc_pad), jnp.float32),
        in_specs=[
            pl.BlockSpec(memory_space=pltpu.MemorySpace.SMEM),   # lam
            pl.BlockSpec(memory_space=pltpu.MemorySpace.VMEM),   # labels
            pl.BlockSpec(memory_space=pltpu.MemorySpace.VMEM),   # flipped labels
        ],
        out_specs=pl.BlockSpec(memory_space=pltpu.MemorySpace.VMEM),
    )(lam_arr, lab, lab_flip)
    return out[:, :num_classes]


# ----------------------------------------------------------------------------
# Module-equivalent wrapper
# ----------------------------------------------------------------------------
class MixUp:
    def __init__(self, alpha=1.0, label_smoothing=0.0, num_classes=400):
        self.alpha = alpha
        self.label_smoothing = label_smoothing
        self.num_classes = num_classes

    def __call__(self, key, x, labels):
        assert x.shape[0] > 1, "MixUp cannot be applied to a single instance."
        # Beta(alpha, alpha) sample (the stochastic part of forward()).
        lam = jax.random.beta(key, self.alpha, self.alpha, dtype=jnp.float32)
        x_mixed = mixup_x(x, lam)
        new_labels = mixup_labels(labels, self.num_classes, lam,
                                  self.label_smoothing)
        return x_mixed, new_labels, lam


if __name__ == "__main__":
    key = jax.random.PRNGKey(0)
    k_x, k_lab, k_beta = jax.random.split(key, 3)

    C, T, H, W = 4, 4, 16, 16
    NUM_CLASSES = 400
    LABEL_SMOOTHING = 0.1
    mixer = MixUp(alpha=1.0, label_smoothing=LABEL_SMOOTHING,
                  num_classes=NUM_CLASSES)

    def reference(x, labels, lam):
        ref_x = x * lam + x[::-1] * (1.0 - lam)
        off = LABEL_SMOOTHING / NUM_CLASSES
        on = 1.0 - LABEL_SMOOTHING + off
        oh = jax.nn.one_hot(labels, NUM_CLASSES) * (on - off) + off
        oh_f = jax.nn.one_hot(labels[::-1], NUM_CLASSES) * (on - off) + off
        return ref_x, oh * lam + oh_f * (1.0 - lam)

    # 1) Even batch (standard paired path).
    B = 2
    x = jax.random.normal(k_x, (B, C, T, H, W), dtype=jnp.float32)
    labels = jax.random.randint(k_lab, (B,), 0, NUM_CLASSES, dtype=jnp.int32)
    x_mixed, new_labels, lam = mixer(k_beta, x, labels)
    x_mixed = jax.block_until_ready(x_mixed)
    new_labels = jax.block_until_ready(new_labels)
    ref_x, ref_labels = reference(x, labels, lam)
    assert x_mixed.shape == (B, C, T, H, W)
    assert new_labels.shape == (B, NUM_CLASSES)
    assert jnp.allclose(x_mixed, ref_x, atol=1e-6)
    assert jnp.allclose(new_labels, ref_labels, atol=1e-6)

    # 2) Odd batch (middle sample mixes with itself).
    B3 = 3
    x3 = jax.random.normal(k_x, (B3, C, T, H, W), dtype=jnp.float32)
    labels3 = jax.random.randint(k_lab, (B3,), 0, NUM_CLASSES, dtype=jnp.int32)
    xm3, nl3, lam3 = mixer(k_beta, x3, labels3)
    xm3 = jax.block_until_ready(xm3)
    nl3 = jax.block_until_ready(nl3)
    ref_x3, ref_l3 = reference(x3, labels3, lam3)
    assert jnp.allclose(xm3, ref_x3, atol=1e-6)
    assert jnp.allclose(nl3, ref_l3, atol=1e-6)

    # 3) Multi-tile pipelined path: tiny target tile forces nR > 1, the row
    #    split (RS=2), the deferred-wait store pipeline and the end-of-sweep
    #    drain, on an odd batch (exercises the write_b guard as well).
    B4 = 3
    x4 = jax.random.normal(k_x, (B4, 5, 8, 16, 16), dtype=jnp.float32)
    lam4 = jnp.float32(0.3)
    xm4 = jax.block_until_ready(
        mixup_x(x4, lam4, target_tile_bytes=8 * 128 * 4))
    ref4 = x4 * lam4 + x4[::-1] * (1.0 - lam4)
    assert jnp.allclose(xm4, ref4, atol=1e-6)

    print("KERNEL_OK")
</pallas_src>

<mosaic_0001>
module attributes {stable_mosaic.version = 11 : i64} {
  func.func @_mix_pair_kernel(%arg0: i32, %arg1: i32, %arg2: i32, %arg3: memref<1xf32, #tpu.memory_space<smem>>, %arg4: memref<1x32x128xf32, #tpu.memory_space<vmem>>, %arg5: memref<1x32x128xf32, #tpu.memory_space<vmem>>, %arg6: memref<2x32x128xf32, #tpu.memory_space<any>>, %arg7: memref<2x32x128xf32, #tpu.memory_space<vmem>>, %arg8: memref<2x32x128xf32, #tpu.memory_space<vmem>>, %arg9: memref<2x2x!tpu.dma_semaphore, #tpu.memory_space<semaphore_mem>>) attributes {dimension_semantics = [#tpu.dimension_semantics<parallel>, #tpu.dimension_semantics<parallel>, #tpu.dimension_semantics<arbitrary>], iteration_bounds = array<i64: 1, 1, 1>, scalar_prefetch = 0 : i64, scratch_operands = 3 : i64, tpu.core_type = #tpu.core_type<tc>, window_params = [{transform_indices = @transform_0, window_bounds = array<i64: 1>}, {transform_indices = @transform_1, window_bounds = array<i64: 1, 32, 128>}, {transform_indices = @transform_2, window_bounds = array<i64: 1, 32, 128>}, {}]} {
    %c0 = arith.constant 0 : index
    %0 = memref.load %arg3[%c0] : memref<1xf32, #tpu.memory_space<smem>>
    %c1_i32 = arith.constant 1 : i32
    %1 = arith.subi %c1_i32, %arg0 : i32
    %c2_i32 = arith.constant 2 : i32
    %c0_i32 = arith.constant 0 : i32
    %2 = arith.cmpi eq, %c2_i32, %c0_i32 : i32
    %c1_i32_0 = arith.constant 1 : i32
    %3 = arith.select %2, %c1_i32_0, %c2_i32 : i32
    %4 = arith.remsi %arg2, %3 : i32
    %c0_i32_1 = arith.constant 0 : i32
    %5 = arith.cmpi ne, %4, %c0_i32_1 : i32
    %c0_i32_2 = arith.constant 0 : i32
    %6 = arith.cmpi slt, %4, %c0_i32_2 : i32
    %c0_i32_3 = arith.constant 0 : i32
    %7 = arith.cmpi slt, %3, %c0_i32_3 : i32
    %8 = arith.xori %6, %7 : i1
    %9 = arith.andi %8, %5 : i1
    %10 = arith.addi %4, %3 : i32
    %11 = arith.select %9, %10, %4 : i32
    %c2_i32_4 = arith.constant 2 : i32
    %12 = arith.cmpi sge, %arg2, %c2_i32_4 : i32
    %13 = arith.extui %12 : i1 to i32
    %c0_i32_5 = arith.constant 0 : i32
    %14 = arith.cmpi ne, %13, %c0_i32_5 : i32
    scf.if %14 {
      %c0_i32_28 = arith.constant 0 : i32
      %c0_i32_29 = arith.constant 0 : i32
      %c0_i32_30 = arith.constant 0 : i32
      %58 = tpu.memref_slice %arg7[%11, %c0_i32_29, %c0_i32_30] : memref<2x32x128xf32, #tpu.memory_space<vmem>> -> memref<1x32x128xf32, #tpu.memory_space<vmem>>
      %59 = tpu.memref_squeeze %58 : memref<1x32x128xf32, #tpu.memory_space<vmem>> -> memref<32x128xf32, #tpu.memory_space<vmem>>
      %c0_i32_31 = arith.constant 0 : i32
      %c0_i32_32 = arith.constant 0 : i32
      %60 = tpu.memref_slice %arg6[%arg0, %c0_i32_31, %c0_i32_32] : memref<2x32x128xf32, #tpu.memory_space<any>> -> memref<1x32x128xf32, #tpu.memory_space<any>>
      %61 = tpu.memref_squeeze %60 : memref<1x32x128xf32, #tpu.memory_space<any>> -> memref<32x128xf32, #tpu.memory_space<any>>
      %62 = tpu.memref_slice %arg9[%11, %c0_i32_28] : memref<2x2x!tpu.dma_semaphore, #tpu.memory_space<semaphore_mem>> -> memref<1x1x!tpu.dma_semaphore, #tpu.memory_space<semaphore_mem>>
      %63 = tpu.memref_squeeze %62 : memref<1x1x!tpu.dma_semaphore, #tpu.memory_space<semaphore_mem>> -> memref<!tpu.dma_semaphore, #tpu.memory_space<semaphore_mem>>
      tpu.wait_dma2 semaphore(%63 : memref<!tpu.dma_semaphore, #tpu.memory_space<semaphore_mem>>) src(%59 : memref<32x128xf32, #tpu.memory_space<vmem>>) dst(%61 : memref<32x128xf32, #tpu.memory_space<any>>)
      %c1_i32_33 = arith.constant 1 : i32
      %c0_i32_34 = arith.constant 0 : i32
      %c0_i32_35 = arith.constant 0 : i32
      %64 = tpu.memref_slice %arg8[%11, %c0_i32_34, %c0_i32_35] : memref<2x32x128xf32, #tpu.memory_space<vmem>> -> memref<1x32x128xf32, #tpu.memory_space<vmem>>
      %65 = tpu.memref_squeeze %64 : memref<1x32x128xf32, #tpu.memory_space<vmem>> -> memref<32x128xf32, #tpu.memory_space<vmem>>
      %c0_i32_36 = arith.constant 0 : i32
      %c0_i32_37 = arith.constant 0 : i32
      %66 = tpu.memref_slice %arg6[%1, %c0_i32_36, %c0_i32_37] : memref<2x32x128xf32, #tpu.memory_space<any>> -> memref<1x32x128xf32, #tpu.memory_space<any>>
      %67 = tpu.memref_squeeze %66 : memref<1x32x128xf32, #tpu.memory_space<any>> -> memref<32x128xf32, #tpu.memory_space<any>>
      %68 = tpu.memref_slice %arg9[%11, %c1_i32_33] : memref<2x2x!tpu.dma_semaphore, #tpu.memory_space<semaphore_mem>> -> memref<1x1x!tpu.dma_semaphore, #tpu.memory_space<semaphore_mem>>
      %69 = tpu.memref_squeeze %68 : memref<1x1x!tpu.dma_semaphore, #tpu.memory_space<semaphore_mem>> -> memref<!tpu.dma_semaphore, #tpu.memory_space<semaphore_mem>>
      tpu.wait_dma2 semaphore(%69 : memref<!tpu.dma_semaphore, #tpu.memory_space<semaphore_mem>>) src(%65 : memref<32x128xf32, #tpu.memory_space<vmem>>) dst(%67 : memref<32x128xf32, #tpu.memory_space<any>>)
    } else {
    }
    %c0_6 = arith.constant 0 : index
    %c0_7 = arith.constant 0 : index
    %c0_8 = arith.constant 0 : index
    %15 = vector.load %arg4[%c0_6, %c0_7, %c0_8] : memref<1x32x128xf32, #tpu.memory_space<vmem>>, vector<1x32x128xf32>
    %16 = vector.shape_cast %15 : vector<1x32x128xf32> to vector<32x128xf32>
    %c0_9 = arith.constant 0 : index
    %c0_10 = arith.constant 0 : index
    %c0_11 = arith.constant 0 : index
    %17 = vector.load %arg5[%c0_9, %c0_10, %c0_11] : memref<1x32x128xf32, #tpu.memory_space<vmem>>, vector<1x32x128xf32>
    %18 = vector.shape_cast %17 : vector<1x32x128xf32> to vector<32x128xf32>
    %19 = vector.broadcast %0 : f32 to vector<32x128xf32>
    %20 = arith.mulf %16, %19 : vector<32x128xf32>
    %cst = arith.constant 1.000000e+00 : f32
    %21 = arith.subf %cst, %0 : f32
    %22 = vector.broadcast %21 : f32 to vector<32x128xf32>
    %23 = arith.mulf %18, %22 : vector<32x128xf32>
    %24 = arith.addf %20, %23 : vector<32x128xf32>
    %25 = arith.index_cast %11 : i32 to index
    %c0_12 = arith.constant 0 : index
    %c0_13 = arith.constant 0 : index
    %26 = vector.load %arg7[%25, %c0_12, %c0_13] : memref<2x32x128xf32, #tpu.memory_space<vmem>>, vector<1x32x128xf32>
    %27 = vector.shape_cast %26 : vector<1x32x128xf32> to vector<32x128xf32>
    %28 = vector.shape_cast %24 : vector<32x128xf32> to vector<1x32x128xf32>
    tpu.vector_store %arg7[%25, %c0_12, %c0_13], %28 {strides = array<i32>} : memref<2x32x128xf32, #tpu.memory_space<vmem>>, vector<1x32x128xf32>,
    %29 = vector.broadcast %0 : f32 to vector<32x128xf32>
    %30 = arith.mulf %18, %29 : vector<32x128xf32>
    %cst_14 = arith.constant 1.000000e+00 : f32
    %31 = arith.subf %cst_14, %0 : f32
    %32 = vector.broadcast %31 : f32 to vector<32x128xf32>
    %33 = arith.mulf %16, %32 : vector<32x128xf32>
    %34 = arith.addf %30, %33 : vector<32x128xf32>
    %35 = arith.index_cast %11 : i32 to index
    %c0_15 = arith.constant 0 : index
    %c0_16 = arith.constant 0 : index
    %36 = vector.load %arg8[%35, %c0_15, %c0_16] : memref<2x32x128xf32, #tpu.memory_space<vmem>>, vector<1x32x128xf32>
    %37 = vector.shape_cast %36 : vector<1x32x128xf32> to vector<32x128xf32>
    %38 = vector.shape_cast %34 : vector<32x128xf32> to vector<1x32x128xf32>
    tpu.vector_store %arg8[%35, %c0_15, %c0_16], %38 {strides = array<i32>} : memref<2x32x128xf32, #tpu.memory_space<vmem>>, vector<1x32x128xf32>,
    %c32_i32 = arith.constant 32 : i32
    %39 = arith.muli %arg1, %c32_i32 : i32
    %c32_i32_17 = arith.constant 32 : i32
    %40 = arith.muli %arg2, %c32_i32_17 : i32
    %41 = arith.addi %39, %40 : i32
    %42 = tpu.assume_multiple %41, 32 : i32
    %c0_i32_18 = arith.constant 0 : i32
    %c0_i32_19 = arith.constant 0 : i32
    %c0_i32_20 = arith.constant 0 : i32
    %43 = tpu.memref_slice %arg7[%11, %c0_i32_19, %c0_i32_20] : memref<2x32x128xf32, #tpu.memory_space<vmem>> -> memref<1x32x128xf32, #tpu.memory_space<vmem>>
    %44 = tpu.memref_squeeze %43 : memref<1x32x128xf32, #tpu.memory_space<vmem>> -> memref<32x128xf32, #tpu.memory_space<vmem>>
    %c0_i32_21 = arith.constant 0 : i32
    %45 = tpu.memref_slice %arg6[%arg0, %42, %c0_i32_21] : memref<2x32x128xf32, #tpu.memory_space<any>> -> memref<1x32x128xf32, #tpu.memory_space<any>>
    %46 = tpu.memref_squeeze %45 : memref<1x32x128xf32, #tpu.memory_space<any>> -> memref<32x128xf32, #tpu.memory_space<any>>
    %47 = tpu.memref_slice %arg9[%11, %c0_i32_18] : memref<2x2x!tpu.dma_semaphore, #tpu.memory_space<semaphore_mem>> -> memref<1x1x!tpu.dma_semaphore, #tpu.memory_space<semaphore_mem>>
    %48 = tpu.memref_squeeze %47 : memref<1x1x!tpu.dma_semaphore, #tpu.memory_space<semaphore_mem>> -> memref<!tpu.dma_semaphore, #tpu.memory_space<semaphore_mem>>
    tpu.enqueue_dma source(%44 : memref<32x128xf32, #tpu.memory_space<vmem>>) target(%46 : memref<32x128xf32, #tpu.memory_space<any>>) target_semaphore(%48 : memref<!tpu.dma_semaphore, #tpu.memory_space<semaphore_mem>>)
    %c1_i32_22 = arith.constant 1 : i32
    %c0_i32_23 = arith.constant 0 : i32
    %c0_i32_24 = arith.constant 0 : i32
    %49 = tpu.memref_slice %arg8[%11, %c0_i32_23, %c0_i32_24] : memref<2x32x128xf32, #tpu.memory_space<vmem>> -> memref<1x32x128xf32, #tpu.memory_space<vmem>>
    %50 = tpu.memref_squeeze %49 : memref<1x32x128xf32, #tpu.memory_space<vmem>> -> memref<32x128xf32, #tpu.memory_space<vmem>>
    %c0_i32_25 = arith.constant 0 : i32
    %51 = tpu.memref_slice %arg6[%1, %42, %c0_i32_25] : memref<2x32x128xf32, #tpu.memory_space<any>> -> memref<1x32x128xf32, #tpu.memory_space<any>>
    %52 = tpu.memref_squeeze %51 : memref<1x32x128xf32, #tpu.memory_space<any>> -> memref<32x128xf32, #tpu.memory_space<any>>
    %53 = tpu.memref_slice %arg9[%11, %c1_i32_22] : memref<2x2x!tpu.dma_semaphore, #tpu.memory_space<semaphore_mem>> -> memref<1x1x!tpu.dma_semaphore, #tpu.memory_space<semaphore_mem>>
    %54 = tpu.memref_squeeze %53 : memref<1x1x!tpu.dma_semaphore, #tpu.memory_space<semaphore_mem>> -> memref<!tpu.dma_semaphore, #tpu.memory_space<semaphore_mem>>
    tpu.enqueue_dma source(%50 : memref<32x128xf32, #tpu.memory_space<vmem>>) target(%52 : memref<32x128xf32, #tpu.memory_space<any>>) target_semaphore(%54 : memref<!tpu.dma_semaphore, #tpu.memory_space<semaphore_mem>>)
    %c0_i32_26 = arith.constant 0 : i32
    %55 = arith.cmpi eq, %arg2, %c0_i32_26 : i32
    %56 = arith.extui %55 : i1 to i32
    %c0_i32_27 = arith.constant 0 : i32
    %57 = arith.cmpi ne, %56, %c0_i32_27 : i32
    scf.if %57 {
      %c0_i32_28 = arith.constant 0 : i32
      %c0_i32_29 = arith.constant 0 : i32
      %c0_i32_30 = arith.constant 0 : i32
      %58 = tpu.memref_slice %arg7[%11, %c0_i32_29, %c0_i32_30] : memref<2x32x128xf32, #tpu.memory_space<vmem>> -> memref<1x32x128xf32, #tpu.memory_space<vmem>>
      %59 = tpu.memref_squeeze %58 : memref<1x32x128xf32, #tpu.memory_space<vmem>> -> memref<32x128xf32, #tpu.memory_space<vmem>>
      %c0_i32_31 = arith.constant 0 : i32
      %c0_i32_32 = arith.constant 0 : i32
      %60 = tpu.memref_slice %arg6[%arg0, %c0_i32_31, %c0_i32_32] : memref<2x32x128xf32, #tpu.memory_space<any>> -> memref<1x32x128xf32, #tpu.memory_space<any>>
      %61 = tpu.memref_squeeze %60 : memref<1x32x128xf32, #tpu.memory_space<any>> -> memref<32x128xf32, #tpu.memory_space<any>>
      %62 = tpu.memref_slice %arg9[%11, %c0_i32_28] : memref<2x2x!tpu.dma_semaphore, #tpu.memory_space<semaphore_mem>> -> memref<1x1x!tpu.dma_semaphore, #tpu.memory_space<semaphore_mem>>
      %63 = tpu.memref_squeeze %62 : memref<1x1x!tpu.dma_semaphore, #tpu.memory_space<semaphore_mem>> -> memref<!tpu.dma_semaphore, #tpu.memory_space<semaphore_mem>>
      tpu.wait_dma2 semaphore(%63 : memref<!tpu.dma_semaphore, #tpu.memory_space<semaphore_mem>>) src(%59 : memref<32x128xf32, #tpu.memory_space<vmem>>) dst(%61 : memref<32x128xf32, #tpu.memory_space<any>>)
      %c1_i32_33 = arith.constant 1 : i32
      %c0_i32_34 = arith.constant 0 : i32
      %c0_i32_35 = arith.constant 0 : i32
      %64 = tpu.memref_slice %arg8[%11, %c0_i32_34, %c0_i32_35] : memref<2x32x128xf32, #tpu.memory_space<vmem>> -> memref<1x32x128xf32, #tpu.memory_space<vmem>>
      %65 = tpu.memref_squeeze %64 : memref<1x32x128xf32, #tpu.memory_space<vmem>> -> memref<32x128xf32, #tpu.memory_space<vmem>>
      %c0_i32_36 = arith.constant 0 : i32
      %c0_i32_37 = arith.constant 0 : i32
      %66 = tpu.memref_slice %arg6[%1, %c0_i32_36, %c0_i32_37] : memref<2x32x128xf32, #tpu.memory_space<any>> -> memref<1x32x128xf32, #tpu.memory_space<any>>
      %67 = tpu.memref_squeeze %66 : memref<1x32x128xf32, #tpu.memory_space<any>> -> memref<32x128xf32, #tpu.memory_space<any>>
      %68 = tpu.memref_slice %arg9[%11, %c1_i32_33] : memref<2x2x!tpu.dma_semaphore, #tpu.memory_space<semaphore_mem>> -> memref<1x1x!tpu.dma_semaphore, #tpu.memory_space<semaphore_mem>>
      %69 = tpu.memref_squeeze %68 : memref<1x1x!tpu.dma_semaphore, #tpu.memory_space<semaphore_mem>> -> memref<!tpu.dma_semaphore, #tpu.memory_space<semaphore_mem>>
      tpu.wait_dma2 semaphore(%69 : memref<!tpu.dma_semaphore, #tpu.memory_space<semaphore_mem>>) src(%65 : memref<32x128xf32, #tpu.memory_space<vmem>>) dst(%67 : memref<32x128xf32, #tpu.memory_space<any>>)
      %c1_i32_38 = arith.constant 1 : i32
      %70 = arith.cmpi sge, %arg2, %c1_i32_38 : i32
      %71 = arith.extui %70 : i1 to i32
      %c0_i32_39 = arith.constant 0 : i32
      %72 = arith.cmpi ne, %71, %c0_i32_39 : i32
      scf.if %72 {
        %c1_i32_40 = arith.constant 1 : i32
        %73 = arith.subi %c1_i32_40, %11 : i32
        %c0_i32_41 = arith.constant 0 : i32
        %c0_i32_42 = arith.constant 0 : i32
        %c0_i32_43 = arith.constant 0 : i32
        %74 = tpu.memref_slice %arg7[%73, %c0_i32_42, %c0_i32_43] : memref<2x32x128xf32, #tpu.memory_space<vmem>> -> memref<1x32x128xf32, #tpu.memory_space<vmem>>
        %75 = tpu.memref_squeeze %74 : memref<1x32x128xf32, #tpu.memory_space<vmem>> -> memref<32x128xf32, #tpu.memory_space<vmem>>
        %c0_i32_44 = arith.constant 0 : i32
        %c0_i32_45 = arith.constant 0 : i32
        %76 = tpu.memref_slice %arg6[%arg0, %c0_i32_44, %c0_i32_45] : memref<2x32x128xf32, #tpu.memory_space<any>> -> memref<1x32x128xf32, #tpu.memory_space<any>>
        %77 = tpu.memref_squeeze %76 : memref<1x32x128xf32, #tpu.memory_space<any>> -> memref<32x128xf32, #tpu.memory_space<any>>
        %78 = tpu.memref_slice %arg9[%73, %c0_i32_41] : memref<2x2x!tpu.dma_semaphore, #tpu.memory_space<semaphore_mem>> -> memref<1x1x!tpu.dma_semaphore, #tpu.memory_space<semaphore_mem>>
        %79 = tpu.memref_squeeze %78 : memref<1x1x!tpu.dma_semaphore, #tpu.memory_space<semaphore_mem>> -> memref<!tpu.dma_semaphore, #tpu.memory_space<semaphore_mem>>
        tpu.wait_dma2 semaphore(%79 : memref<!tpu.dma_semaphore, #tpu.memory_space<semaphore_mem>>) src(%75 : memref<32x128xf32, #tpu.memory_space<vmem>>) dst(%77 : memref<32x128xf32, #tpu.memory_space<any>>)
        %c1_i32_46 = arith.constant 1 : i32
        %c0_i32_47 = arith.constant 0 : i32
        %c0_i32_48 = arith.constant 0 : i32
        %80 = tpu.memref_slice %arg8[%73, %c0_i32_47, %c0_i32_48] : memref<2x32x128xf32, #tpu.memory_space<vmem>> -> memref<1x32x128xf32, #tpu.memory_space<vmem>>
        %81 = tpu.memref_squeeze %80 : memref<1x32x128xf32, #tpu.memory_space<vmem>> -> memref<32x128xf32, #tpu.memory_space<vmem>>
        %c0_i32_49 = arith.constant 0 : i32
        %c0_i32_50 = arith.constant 0 : i32
        %82 = tpu.memref_slice %arg6[%1, %c0_i32_49, %c0_i32_50] : memref<2x32x128xf32, #tpu.memory_space<any>> -> memref<1x32x128xf32, #tpu.memory_space<any>>
        %83 = tpu.memref_squeeze %82 : memref<1x32x128xf32, #tpu.memory_space<any>> -> memref<32x128xf32, #tpu.memory_space<any>>
        %84 = tpu.memref_slice %arg9[%73, %c1_i32_46] : memref<2x2x!tpu.dma_semaphore, #tpu.memory_space<semaphore_mem>> -> memref<1x1x!tpu.dma_semaphore, #tpu.memory_space<semaphore_mem>>
        %85 = tpu.memref_squeeze %84 : memref<1x1x!tpu.dma_semaphore, #tpu.memory_space<semaphore_mem>> -> memref<!tpu.dma_semaphore, #tpu.memory_space<semaphore_mem>>
        tpu.wait_dma2 semaphore(%85 : memref<!tpu.dma_semaphore, #tpu.memory_space<semaphore_mem>>) src(%81 : memref<32x128xf32, #tpu.memory_space<vmem>>) dst(%83 : memref<32x128xf32, #tpu.memory_space<any>>)
      } else {
      }
    } else {
    }
    return
  }
  func.func @transform_0(%arg0: i32, %arg1: i32, %arg2: i32) -> i32 {
    %c0_i32 = arith.constant 0 : i32
    %c0_i32_0 = arith.constant 0 : i32
    return %c0_i32 : i32
  }
  func.func @transform_1(%arg0: i32, %arg1: i32, %arg2: i32) -> (i32, i32, i32) {
    %c1_i32 = arith.constant 1 : i32
    %0 = arith.muli %arg1, %c1_i32 : i32
    %1 = arith.addi %0, %arg2 : i32
    %c0_i32 = arith.constant 0 : i32
    %c0_i32_0 = arith.constant 0 : i32
    return %arg0, %1, %c0_i32 : i32, i32, i32
  }
  func.func @transform_2(%arg0: i32, %arg1: i32, %arg2: i32) -> (i32, i32, i32) {
    %c1_i32 = arith.constant 1 : i32
    %0 = arith.subi %c1_i32, %arg0 : i32
    %c1_i32_0 = arith.constant 1 : i32
    %1 = arith.muli %arg1, %c1_i32_0 : i32
    %2 = arith.addi %1, %arg2 : i32
    %c0_i32 = arith.constant 0 : i32
    %c0_i32_1 = arith.constant 0 : i32
    return %0, %2, %c0_i32 : i32, i32, i32
  }
}

</mosaic_0001>

<llo_original>
// kernel: tpu_custom_call.1
$region0: #{tpu_custom_call.1}
  #allocation0 [shape = 'u32[]', space=smem, size = 0x4, offset = 0x4, fixed_abs, tag = 'smem constant byte address 0x4 - core index']
  #allocation1 [shape = 'u32[144,128]{1,0:T(1,128)}', space=vmem, size = 0x12000, scoped, tag = 'internal scratch']
  #allocation2 [shape = 'f32[2,32,128]{2,1,0:T(8,128)}', space=vmem, size = 0x8000, scoped, tag = 'scratch operand']
  #allocation3 [shape = 'f32[2,32,128]{2,1,0:T(8,128)}', space=vmem, size = 0x8000, scoped, tag = 'scratch operand']
  #allocation4 [shape = 's32[4]{0}', space=sflag, size = 0x10, scoped, tag = 'scratch operand']
  #allocation5 [shape = 'f32[1]{0:T(128)S(6)}', space=smem, size = 0x200, scoped, tag = 'scoped memory for tpu_custom_call.1']
  #allocation10 [shape = 's32[]', space=sflag, size = 0x4, offset = 0, fixed_abs, tag = 'sflag constant byte address 0x0 - dummy sync flag']
  #allocation11 [shape = 's32[]', space=sflag, size = 0x4, offset = 0, fixed_abs, tag = 'sflag constant byte address 0x0 - dummy sync flag']
  #allocation12 [shape = 'u32[]', space=smem, size = 0x4, offset = 0x44, fixed_abs, tag = 'smem constant byte address 0x44 - assertion arg 0']
  #allocation13 [shape = 'u32[]', space=smem, size = 0x4, offset = 0x48, fixed_abs, tag = 'smem constant byte address 0x48 - assertion arg 1']
  #allocation14 [shape = 's32[]', space=sflag, size = 0x4, offset = 0, fixed_abs, tag = 'sflag constant byte address 0x0 - dummy sync flag']
  #allocation15 [shape = 's32[]', space=sflag, size = 0x4, offset = 0, fixed_abs, tag = 'sflag constant byte address 0x0 - dummy sync flag']
  %s0 = inlined_call_operand.<no memory space> [shape: f32[1], index: 0, kind: input, shape index: {}]
  %s1 = inlined_call_operand.hbm [shape: f32[2,32,128], index: 1, kind: input, shape index: {}]
  %s2 = inlined_call_operand.hbm [shape: f32[2,32,128], index: 2, kind: input, shape index: {}]
  %s3 = inlined_call_operand.hbm [shape: f32[2,32,128], index: 3, kind: output, shape index: {}]
  %s4 = sld [smem:[#allocation0]]
  $region42: #{tpu_custom_call.1} parent=0
    _
  %s6 = ssub.s32 1, %s4
  %s7 = scalar_select 0, %s6, %s4
  %8 = sst [smem:[#allocation5]] %s0
  $region1: #{tpu_custom_call.1} parent=0
    #allocation6 [shape = 'u8[16384]{0}', space=vmem, size = 0x4000, scoped, tag = 'input window, operand 1, single buffered']
    #allocation7 [shape = 's32[1]{0}', space=sflag, size = 0x4, scoped, tag = 'scoped memory for tpu_custom_call.1']
    #allocation8 [shape = 'u8[16384]{0}', space=vmem, size = 0x4000, scoped, tag = 'input window, operand 2, single buffered']
    #allocation9 [shape = 's32[1]{0}', space=sflag, size = 0x4, scoped, tag = 'scoped memory for tpu_custom_call.1']
    %9 = vsyncpa [#allocation7], 0
    %10 = vsyncpa [#allocation9], 0
    // Predicated region
    $region2: #{tpu_custom_call.1} parent=1 // pred_check
      _
    $region3: #{tpu_custom_call.1} parent=1 // pred_check_branch
      %12 = sbr.rel (0) target = $region5
    $region4: #{tpu_custom_call.1} parent=1 // pred_region
      _
    $region5: #{tpu_custom_call.1} parent=1 // pred_fallthru
      _
    // Predicated region
    $region6: #{tpu_custom_call.1} parent=1 // pred_check
      _
    $region7: #{tpu_custom_call.1} parent=1 // pred_check_branch
      %14 = sbr.rel (0) target = $region9
    $region8: #{tpu_custom_call.1} parent=1 // pred_region
      %s15 = sadd.s32 0, 0
      %s16 = smul.u32 4, %s15
      %s18 = ssub.s32 512, 512
      %19 = vsyncadd [#allocation7], %s18
      %s20 = smul.addr %s16, 128
      %s21 = scalar_lea.hbm %s1, %s20
      %s22 = sshll.u32 [#allocation6], 4
      %s23 = int_to_ptr.vmem [resolvable:$true] %s22
      %28 = dma.hbm_to_vmem [thread:$0]  %s21, 512, %s23, [#allocation7], 128, 128, 8
    $region9: #{tpu_custom_call.1} parent=1 // pred_fallthru
      _
    // Predicated region
    $region10: #{tpu_custom_call.1} parent=1 // pred_check
      _
    $region11: #{tpu_custom_call.1} parent=1 // pred_check_branch
      %30 = sbr.rel (0) target = $region13
    $region12: #{tpu_custom_call.1} parent=1 // pred_region
      %s31 = ssub.s32 1, 0
      %s32 = sadd.s32 0, 0
      %s33 = smul.u32 4, %s32
      %s35 = ssub.s32 512, 512
      %36 = vsyncadd [#allocation9], %s35
      %s37 = smul.addr %s31, 4
      %s38 = sadd.s32 %s33, %s37
      %s39 = smul.addr %s38, 128
      %s40 = scalar_lea.hbm %s2, %s39
      %s41 = sshll.u32 [#allocation8], 4
      %s42 = int_to_ptr.vmem [resolvable:$true] %s41
      %47 = dma.hbm_to_vmem [thread:$0]  %s40, 512, %s42, [#allocation9], 128, 128, 8
    $region13: #{tpu_custom_call.1} parent=1 // pred_fallthru
      _
    // Predicated region
    $region14: #{tpu_custom_call.1} parent=1 // pred_check
      _
    $region15: #{tpu_custom_call.1} parent=1 // pred_check_branch
      %49 = sbr.rel (0) target = $region17
    $region16: #{tpu_custom_call.1} parent=1 // pred_region
      %50 = dma.done [#allocation7], 512
    $region17: #{tpu_custom_call.1} parent=1 // pred_fallthru
      _
    // Predicated region
    $region18: #{tpu_custom_call.1} parent=1 // pred_check
      _
    $region19: #{tpu_custom_call.1} parent=1 // pred_check_branch
      %52 = sbr.rel (0) target = $region21
    $region20: #{tpu_custom_call.1} parent=1 // pred_region
      %53 = dma.done [#allocation9], 512
    $region21: #{tpu_custom_call.1} parent=1 // pred_fallthru
      _
    %s54 = sadd.s32 0, 0
    %s55 = smul.u32 4, %s54
    %s56 = ssub.s32 1, 0
    %s57 = sadd.s32 0, 0
    %s58 = smul.u32 4, %s57
    %s59 = sld [smem:[#allocation5]]
    %s60 = ssub.s32 1, 0
    %s61 = ssub.s32 0, 0
    %s62 = ssub.s32 0, 0
    %p63 = scmp.ne.s32.totalorder 0, 0
    %p64 = scmp.lt.s32.totalorder 0, 0
    %p65 = pnand %p64, %p63
    %p66 = pneg %p65
    %s67 = sadd.s32 0, 2
    %s68 = scalar_select %p66, %s67, 0
    %p69 = scmp.ge.s32.totalorder 0, 2
    // Predicated region
    $region22: #{tpu_custom_call.1} parent=1 // pred_check
      %p70 = pneg %p69
    $region23: #{tpu_custom_call.1} parent=1 // pred_check_branch
      %72 = sbr.rel (%p70) target = $region25
    $region24: #{tpu_custom_call.1} parent=1 // pred_region
      %s73 = smul.u32 %s68, 2
      %s74 = scalar_lea.sflag [#allocation4], %s73
      %s75 = smul.u32 32, 1
      %s76 = sshll.u32 %s75, 4
      %77 = dma.done %s74, %s76
      %s78 = sadd.s32 1, %s73
      %s79 = scalar_lea.sflag [#allocation4], %s78
      %s80 = sshll.u32 %s75, 4
      %81 = dma.done %s79, %s80
    $region25: #{tpu_custom_call.1} parent=1 // pred_fallthru
      _
    %v82 = vld [vmem:[#allocation6] sm:$0xff]
    %v83 = vld [vmem:[#allocation6 + $0x8] sm:$0xff]
    %v84 = vld [vmem:[#allocation6 + $0x10] sm:$0xff]
    %v85 = vld [vmem:[#allocation6 + $0x18] sm:$0xff]
    %v86 = vld [vmem:[#allocation8] sm:$0xff]
    %v87 = vld [vmem:[#allocation8 + $0x8] sm:$0xff]
    %v88 = vld [vmem:[#allocation8 + $0x10] sm:$0xff]
    %v89 = vld [vmem:[#allocation8 + $0x18] sm:$0xff]
    %v90 = vstv %s59
    %v91 = vmul.f32 %v82, %v90
    %v92 = vmul.f32 %v83, %v90
    %v93 = vmul.f32 %v84, %v90
    %v94 = vmul.f32 %v85, %v90
    %s95 = ssub.f32 1.0, %s59
    %v96 = vstv %s95
    %v97 = vmul.f32 %v86, %v96
    %v98 = vmul.f32 %v87, %v96
    %v99 = vmul.f32 %v88, %v96
    %v100 = vmul.f32 %v89, %v96
    %v101 = vadd.f32 %v91, %v97
    %v102 = vadd.f32 %v92, %v98
    %v103 = vadd.f32 %v93, %v99
    %v104 = vadd.f32 %v94, %v100
    %s105 = smul.u32 %s68, 32
    %s106 = scalar_lea.vmem [#allocation2], %s105
    %107 = vst [vmem:[%s106] sm:$0xff] %v101
    %108 = vst [vmem:[%s106 + $0x8] sm:$0xff] %v102
    %109 = vst [vmem:[%s106 + $0x10] sm:$0xff] %v103
    %110 = vst [vmem:[%s106 + $0x18] sm:$0xff] %v104
    %v111 = vmul.f32 %v86, %v90
    %v112 = vmul.f32 %v87, %v90
    %v113 = vmul.f32 %v88, %v90
    %v114 = vmul.f32 %v89, %v90
    %v115 = vmul.f32 %v82, %v96
    %v116 = vmul.f32 %v83, %v96
    %v117 = vmul.f32 %v84, %v96
    %v118 = vmul.f32 %v85, %v96
    %v119 = vadd.f32 %v111, %v115
    %v120 = vadd.f32 %v112, %v116
    %v121 = vadd.f32 %v113, %v117
    %v122 = vadd.f32 %v114, %v118
    %s123 = scalar_lea.vmem [#allocation3], %s105
    %124 = vst [vmem:[%s123] sm:$0xff] %v119
    %125 = vst [vmem:[%s123 + $0x8] sm:$0xff] %v120
    %126 = vst [vmem:[%s123 + $0x10] sm:$0xff] %v121
    %127 = vst [vmem:[%s123 + $0x18] sm:$0xff] %v122
    %s128 = smul.u32 0, 32
    %s129 = smul.u32 0, 32
    %s130 = sadd.s32 %s128, %s129
    %s131 = smul.u32 0, 32
    %s132 = sadd.s32 %s130, %s131
    %s133 = smul.addr %s132, 16
    %s134 = scalar_lea.hbm %s3, %s133
    %s135 = smul.u32 %s68, 2
    %s136 = scalar_lea.sflag [#allocation4], %s135
    // Predicated region
    $region26: #{tpu_custom_call.1} parent=1 // pred_check
      _
    $region27: #{tpu_custom_call.1} parent=1 // pred_check_branch
      %138 = sbr.rel target = $region29
    $region28: #{tpu_custom_call.1} parent=1 // pred_region
      %139 = sst [smem:[#allocation12]] [#allocation11]
      %140 = sst [smem:[#allocation13]] [#allocation10]
    $region29: #{tpu_custom_call.1} parent=1 // pred_fallthru
      _
    %142 = shalt.err (0)
    %s144 = sshll.u32 %s106, 4
    %s145 = int_to_ptr.vmem [resolvable:$true] %s144
    %147 = dma.vmem_to_hbm [thread:$0]  %s145, 512, %s134, %s136
    %s148 = smul.u32 %s60, 32
    %s149 = sadd.s32 %s130, %s148
    %s150 = smul.addr %s149, 16
    %s151 = scalar_lea.hbm %s3, %s150
    %s152 = sadd.s32 1, %s135
    %s153 = scalar_lea.sflag [#allocation4], %s152
    // Predicated region
    $region30: #{tpu_custom_call.1} parent=1 // pred_check
      _
    $region31: #{tpu_custom_call.1} parent=1 // pred_check_branch
      %155 = sbr.rel target = $region33
    $region32: #{tpu_custom_call.1} parent=1 // pred_region
      %156 = sst [smem:[#allocation12]] [#allocation15]
      %157 = sst [smem:[#allocation13]] [#allocation14]
    $region33: #{tpu_custom_call.1} parent=1 // pred_fallthru
      _
    %159 = shalt.err (0)
    %s161 = sshll.u32 %s123, 4
    %s162 = int_to_ptr.vmem [resolvable:$true] %s161
    %164 = dma.vmem_to_hbm [thread:$0]  %s162, 512, %s151, %s153
    %p165 = scmp.eq.s32.totalorder 0, 0
    // Predicated region
    $region34: #{tpu_custom_call.1} parent=1 // pred_check
      %p166 = pneg %p165
    $region35: #{tpu_custom_call.1} parent=1 // pred_check_branch
      %168 = sbr.rel (%p166) target = $region37
    $region36: #{tpu_custom_call.1} parent=1 // pred_region
      %s169 = smul.u32 32, 1
      %s170 = sshll.u32 %s169, 4
      %171 = dma.done %s136, %s170
      %s172 = sshll.u32 %s169, 4
      %173 = dma.done %s153, %s172
      %p174 = scmp.ge.s32.totalorder 0, 1
      // Predicated region
      $region38: #{tpu_custom_call.1} parent=36 // pred_check
        %p175 = pneg %p174
      $region39: #{tpu_custom_call.1} parent=36 // pred_check_branch
        %177 = sbr.rel (%p175) target = $region41
      $region40: #{tpu_custom_call.1} parent=36 // pred_region
        %s178 = ssub.s32 1, %s68
        %s179 = smul.u32 %s178, 2
        %s180 = scalar_lea.sflag [#allocation4], %s179
        %s181 = sshll.u32 %s169, 4
        %182 = dma.done %s180, %s181
        %s183 = sadd.s32 1, %s179
        %s184 = scalar_lea.sflag [#allocation4], %s183
        %s185 = sshll.u32 %s169, 4
        %186 = dma.done %s184, %s185
      $region41: #{tpu_custom_call.1} parent=36 // pred_fallthru
        _
    $region37: #{tpu_custom_call.1} parent=1 // pred_fallthru
      _
    %187 = vsyncpa [#allocation7], 1
    %188 = vsyncpa [#allocation9], 1
  %189 = vsyncmov [#allocation4]
  %s190 = vpop.sfrf %189
  %p191 = scmp.eq.s32.totalorder %s190, 0
  %p192 = pneg %p191
  %194 = shalt.err (%p192)
  %s195 = scalar_lea.sflag [#allocation4], 1
  %196 = vsyncmov %s195
  %s197 = vpop.sfrf %196
  %p198 = scmp.eq.s32.totalorder %s197, 0
  %p199 = pneg %p198
  %201 = shalt.err (%p199)
  %s202 = scalar_lea.sflag [#allocation4], 2
  %203 = vsyncmov %s202
  %s204 = vpop.sfrf %203
  %p205 = scmp.eq.s32.totalorder %s204, 0
  %p206 = pneg %p205
  %208 = shalt.err (%p206)
  %s209 = scalar_lea.sflag [#allocation4], 3
  %210 = vsyncmov %s209
  %s211 = vpop.sfrf %210
  %p212 = scmp.eq.s32.totalorder %s211, 0
  %p213 = pneg %p212
  %215 = shalt.err (%p213)

</llo_original>
